<compile_context>
chip_gen: v6e
topology: v6e:2x2x1
jax: 0.10.0
libtpu: 0.0.40
codegen_flags: <defaults>
</compile_context>

<pallas_src>
import jax
import jax.numpy as jnp
from jax.experimental import pallas as pl
from jax.experimental.pallas import tpu as pltpu

_MIB = 1024 * 1024


# ---------------------------------------------------------------------------
# Generation-aware tiling / VMEM plan.
# ---------------------------------------------------------------------------
def _device_kind():
    try:
        return jax.devices()[0].device_kind.lower()
    except Exception:  # pragma: no cover - CPU / interpret fallback
        return ""


def _default_tiles():
    if "v7" in _device_kind():
        # v7x: ~3.2 TB/s HBM -> bigger tiles needed to hide per-step overhead.
        return 2048, 1024          # (tile_n, tile_k): 4 MiB bf16 A tile
    # v5e / v6e: 512x1024 bf16 tiles (1 MiB) already reach ~85% of roofline.
    return 1024, 512


def _round_up(x, m):
    return ((x + m - 1) // m) * m


def _plan_tiles(n, tile_n=None, tile_k=None):
    """Returns (n_pad, tn, tk) with tk | tn | n_pad and everything % 128 == 0."""
    if tile_n is None or tile_k is None:
        dn, dk = _default_tiles()
        tile_n = tile_n or dn
        tile_k = tile_k or dk
    assert tile_n % tile_k == 0, "tile_k must divide tile_n"
    n128 = _round_up(max(n, 1), 128)
    if n128 <= tile_k:
        return n128, n128, n128
    if n128 <= tile_n:
        n_pad = _round_up(n128, tile_k)
        return n_pad, n_pad, tile_k
    n_pad = _round_up(n128, tile_n)
    return n_pad, tile_n, tile_k


def _vmem_limit_bytes(tn, tk, d_stream, out_rows, buffers):
    need = (buffers * tk * tn * 2          # A_hat tiles (bf16, multi-buffered)
            + 2 * d_stream * tk * 2        # streamed G k-tiles (bf16)
            + 2 * out_rows * tn * 4        # output tiles (<= f32)
            + d_stream * tn * 4            # f32 accumulator
            + 2 * _MIB)                    # weights / bias / headroom
    cap = 48 * _MIB if "v7" in _device_kind() else 96 * _MIB
    return int(min(cap, max(32 * _MIB, 2 * need)))


# ---------------------------------------------------------------------------
# Kernel 1: one GCNConv aggregation layer in transposed (node-on-lanes) layout.
#   acc[:, j] = sum_k G[:, k] * A[k, j]      (bf16 x bf16 -> f32 on the MXU)
#   out[:, j] = epilogue(acc, mat, bias)     (f32 VPU/EUP/MXU epilogue)
# grid = (node-column tiles of A_hat, contraction tiles over A_hat rows)
# ---------------------------------------------------------------------------
def _make_agg_kernel(epilogue):
    def kernel(g_ref, a_ref, m_ref, b_ref, out_ref, acc_ref):
        k = pl.program_id(1)

        @pl.when(k == 0)
        def _():
            acc_ref[...] = jnp.zeros_like(acc_ref)

        acc_ref[...] += jnp.dot(g_ref[...], a_ref[...],
                                preferred_element_type=jnp.float32)

        @pl.when(k == pl.num_programs(1) - 1)
        def _():
            out_ref[...] = epilogue(acc_ref[...], m_ref[...],
                                    b_ref[...]).astype(out_ref.dtype)

    return kernel


def _epilogue_hidden_project(acc, w_next_t, b_col):
    # h = tanh(acc + b) in f32 (v5e-safe EUP path), then emit the NEXT layer's
    # pre-projection G_next = W_next^T @ h so layer 2 also streams 32 rows.
    h = jnp.tanh(acc + b_col)
    return jnp.dot(w_next_t, h, preferred_element_type=jnp.float32)


def _epilogue_classifier(acc, wc_col, b_col):
    # h = tanh(acc + b); per-node classifier logit = wc^T h as a VPU
    # broadcast-multiply + sublane reduce (no width-1 MXU matmul, no MRF drain).
    h = jnp.tanh(acc + b_col)
    return jnp.sum(h * wc_col, axis=0, keepdims=True)


def _gcn_agg(g_t, a_pad, mat, b_col, *, epilogue, out_rows, out_dtype,
             tn, tk, buffers=2):
    d, n_pad = g_t.shape
    grid = (n_pad // tn, n_pad // tk)

    if buffers > 2:
        a_spec = pl.BlockSpec((tk, tn), lambda j, k: (k, j),
                              pipeline_mode=pl.Buffered(buffers))
    else:
        a_spec = pl.BlockSpec((tk, tn), lambda j, k: (k, j))

    return pl.pallas_call(
        _make_agg_kernel(epilogue),
        out_shape=jax.ShapeDtypeStruct((out_rows, n_pad), out_dtype),
        grid_spec=pltpu.PrefetchScalarGridSpec(
            num_scalar_prefetch=0,
            grid=grid,
            in_specs=[
                pl.BlockSpec((d, tk), lambda j, k: (0, k)),       # G k-tile
                a_spec,                                           # A_hat tile
                pl.BlockSpec(mat.shape, lambda j, k: (0, 0)),     # resident mat
                pl.BlockSpec(b_col.shape, lambda j, k: (0, 0)),   # bias column
            ],
            out_specs=pl.BlockSpec((out_rows, tn), lambda j, k: (0, j)),
            scratch_shapes=[pltpu.VMEM((d, tn), jnp.float32)],
        ),
        compiler_params=pltpu.CompilerParams(
            # TODO(synk): on v7x verify the j axis shards across both
            # TensorCores; switch to pltpu.CORE_PARALLEL if it does not.
            dimension_semantics=("parallel", "arbitrary"),
            vmem_limit_bytes=_vmem_limit_bytes(tn, tk, d, out_rows,
                                               max(buffers, 2)),
        ),
    )(g_t, a_pad, mat, b_col)


# ---------------------------------------------------------------------------
# Kernel 2: masked softmax over the node (lane) axis of the fused logits.
# ---------------------------------------------------------------------------
def _masked_softmax_kernel(n_ref, logits_ref, out_ref):
    valid = jax.lax.broadcasted_iota(jnp.int32, logits_ref.shape, 1) < n_ref[0]
    z = jnp.where(valid, logits_ref[...], -1e30)        # mask padded nodes
    m = jnp.max(z, axis=1, keepdims=True)
    e = jnp.where(valid, jnp.exp(z - m), 0.0)
    s = jnp.sum(e, axis=1, keepdims=True)
    out_ref[...] = e * pl.reciprocal(s, approx=True)


def _masked_softmax(logits_pad, num_nodes):
    n_pad = logits_pad.shape[1]
    return pl.pallas_call(
        _masked_softmax_kernel,
        out_shape=jax.ShapeDtypeStruct((1, n_pad), jnp.float32),
        in_specs=[
            pl.BlockSpec(memory_space=pltpu.MemorySpace.SMEM),
            pl.BlockSpec(memory_space=pltpu.MemorySpace.VMEM),
        ],
        out_specs=pl.BlockSpec(memory_space=pltpu.MemorySpace.VMEM),
    )(jnp.array([num_nodes], jnp.int32), logits_pad)


# ---------------------------------------------------------------------------
# Forward pass wrapper.  a_pad_bf16 is the HOISTED, pre-padded bf16 adjacency
# produced once per graph by prepare_adjacency (not per forward call).
# ---------------------------------------------------------------------------
def gcn_actor1_forward(x, a_pad_bf16, params, num_nodes, *, tn, tk, buffers=2):
    n_pad = a_pad_bf16.shape[0]
    f = x.shape[1]

    # Zero-pad node features to n_pad (tiny vs. the O(N^2) adjacency).
    x_pad = jnp.zeros((n_pad, f), x.dtype).at[:num_nodes].set(x)

    # Associativity: W1^T (X^T A) == (W1^T X^T) A.  G1 is only [H1, N_pad]
    # (negligible HBM) and raises the streamed-LHS row count from F=4 to H1=32.
    g1 = (x_pad @ params["w1"]).T.astype(jnp.bfloat16)            # [H1, n_pad]

    # Layer 1: aggregate + bias + tanh; epilogue also emits G2 = W2^T H1.
    g2 = _gcn_agg(g1, a_pad_bf16, params["w2"].T, params["b1"].T,
                  epilogue=_epilogue_hidden_project,
                  out_rows=params["w2"].shape[1], out_dtype=jnp.bfloat16,
                  tn=tn, tk=tk, buffers=buffers)                  # [H2, n_pad]

    # Layer 2: aggregate + bias + tanh fused with the per-node classifier
    # logits (H2 never round-trips HBM).  bc omitted: softmax is shift
    # invariant, so the forward semantics are unchanged.
    logits = _gcn_agg(g2, a_pad_bf16, params["wc"], params["b2"].T,
                      epilogue=_epilogue_classifier,
                      out_rows=1, out_dtype=jnp.float32,
                      tn=tn, tk=tk, buffers=buffers)              # [1, n_pad]

    probs = _masked_softmax(logits, num_nodes)                    # [1, n_pad]
    return probs[0, :num_nodes]                                   # [N]


# ---------------------------------------------------------------------------
# Plain-JAX glue: dense normalized adjacency (+ hoisted pad/cast), params,
# and pure-JAX references.
# ---------------------------------------------------------------------------
def build_normalized_adjacency(edge_index, num_nodes):
    """Dense A_hat = D^-1/2 (A + I) D^-1/2, matching PyG GCNConv defaults."""
    src = edge_index[0]
    dst = edge_index[1]
    a = jnp.zeros((num_nodes, num_nodes), jnp.float32)
    a = a.at[dst, src].set(1.0)                            # message j -> i
    a = a + jnp.eye(num_nodes, dtype=jnp.float32)          # self loops
    deg = jnp.sum(a, axis=1)
    d_inv_sqrt = jnp.where(deg > 0, 1.0 / jnp.sqrt(deg), 0.0)
    return a * d_inv_sqrt[:, None] * d_inv_sqrt[None, :]


def prepare_adjacency(a_hat_f32, n_pad):
    """Hoisted once per graph: zero-pad to the tile plan and cast to bf16 so
    no per-forward XLA op ever touches the O(N^2) operand again."""
    n = a_hat_f32.shape[0]
    a = jnp.zeros((n_pad, n_pad), jnp.bfloat16)
    return a.at[:n, :n].set(a_hat_f32.astype(jnp.bfloat16))


def init_params(key, feature1_dim, hidden1_dim, hidden2_dim):
    """Deterministic synthetic parameters (glorot-style scaling)."""
    k1, k2, k3 = jax.random.split(key, 3)

    def glorot(k, shape):
        fan_in, fan_out = shape[0], shape[1]
        lim = jnp.sqrt(6.0 / (fan_in + fan_out))
        return jax.random.uniform(k, shape, jnp.float32, -lim, lim)

    return {
        "w1": glorot(k1, (feature1_dim, hidden1_dim)),
        "b1": jnp.zeros((1, hidden1_dim), jnp.float32),
        "w2": glorot(k2, (hidden1_dim, hidden2_dim)),
        "b2": jnp.zeros((1, hidden2_dim), jnp.float32),
        "wc": glorot(k3, (hidden2_dim, 1)),
        "bc": jnp.zeros((1, 1), jnp.float32),
    }


def reference_forward_f32(x, a_hat, params):
    """Pure f32 reference (original module math)."""
    h = jnp.tanh(a_hat @ (x @ params["w1"]) + params["b1"])
    h = jnp.tanh(a_hat @ (h @ params["w2"]) + params["b2"])
    logits = (h @ params["wc"] + params["bc"])[:, 0]
    return jax.nn.softmax(logits, axis=0)


def reference_forward_matched(x, a_hat, params):
    """Same math with the kernel's exact dtype plan (pre-projection + bf16 A)."""
    a_bf = a_hat.astype(jnp.bfloat16)
    g1 = (x @ params["w1"]).T.astype(jnp.bfloat16)                  # [H1, N]
    z1 = jnp.dot(g1, a_bf, preferred_element_type=jnp.float32)
    h1 = jnp.tanh(z1 + params["b1"].T)
    g2 = jnp.dot(params["w2"].T, h1).astype(jnp.bfloat16)           # [H2, N]
    z2 = jnp.dot(g2, a_bf, preferred_element_type=jnp.float32)
    h2 = jnp.tanh(z2 + params["b2"].T)
    logits = jnp.sum(h2 * params["wc"], axis=0)
    return jax.nn.softmax(logits, axis=0)


if __name__ == "__main__":
    key = jax.random.PRNGKey(0)
    kx, kp = jax.random.split(key)

    # Small graph: N=8 nodes, feature1_dim=4, hidden1=32, hidden2=32.
    num_nodes = 8
    feature1_dim, hidden1_dim, hidden2_dim = 4, 32, 32

    x = jax.random.normal(kx, (num_nodes, feature1_dim), jnp.float32)

    # Simple bidirectional ring graph, edge_index shaped [2, E] like PyG.
    src = jnp.arange(num_nodes, dtype=jnp.int32)
    dst = (src + 1) % num_nodes
    edge_index = jnp.stack(
        [jnp.concatenate([src, dst]), jnp.concatenate([dst, src])], axis=0)

    a_hat = build_normalized_adjacency(edge_index, num_nodes)
    params = init_params(kp, feature1_dim, hidden1_dim, hidden2_dim)

    # Tile plan + hoisted pad/cast of A_hat (once per graph, not per call).
    n_pad, tn, tk = _plan_tiles(num_nodes)
    a_pad = jax.block_until_ready(prepare_adjacency(a_hat, n_pad))

    out = jax.block_until_ready(
        gcn_actor1_forward(x, a_pad, params, num_nodes, tn=tn, tk=tk))

    ref_bf = reference_forward_matched(x, a_hat, params)
    ref_32 = reference_forward_f32(x, a_hat, params)

    assert out.shape == (num_nodes,)
    assert jnp.allclose(jnp.sum(out), 1.0, atol=1e-3)
    # Tight check vs a reference with identical bf16 casts / re-association.
    assert jnp.allclose(out, ref_bf, atol=5e-3, rtol=5e-3), (out, ref_bf)
    # Loose sanity check vs the full-precision original math (bf16 A_hat).
    assert jnp.allclose(out, ref_32, atol=5e-2, rtol=1e-1), (out, ref_32)

    print("KERNEL_OK")
</pallas_src>

<mosaic_0001>
module attributes {stable_mosaic.version = 11 : i64} {
  func.func @kernel(%arg0: i32, %arg1: i32, %arg2: memref<32x128xbf16, #tpu.memory_space<vmem>>, %arg3: memref<128x128xbf16, #tpu.memory_space<vmem>>, %arg4: memref<32x32xf32, #tpu.memory_space<vmem>>, %arg5: memref<32x1xf32, #tpu.memory_space<vmem>>, %arg6: memref<32x128xbf16, #tpu.memory_space<vmem>>, %arg7: memref<32x128xf32, #tpu.memory_space<vmem>>) attributes {dimension_semantics = [#tpu.dimension_semantics<parallel>, #tpu.dimension_semantics<arbitrary>], iteration_bounds = array<i64: 1, 1>, scalar_prefetch = 0 : i64, scratch_operands = 1 : i64, tpu.core_type = #tpu.core_type<tc>, window_params = [{transform_indices = @transform_0, window_bounds = array<i64: 32, 128>}, {transform_indices = @transform_1, window_bounds = array<i64: 128, 128>}, {pipeline_mode = #tpu.pipeline_mode<synchronous>, transform_indices = @transform_2, window_bounds = array<i64: 32, 32>}, {pipeline_mode = #tpu.pipeline_mode<synchronous>, transform_indices = @transform_3, window_bounds = array<i64: 32, 1>}, {transform_indices = @transform_4, window_bounds = array<i64: 32, 128>}]} {
    %c0_i32 = arith.constant 0 : i32
    %0 = arith.cmpi eq, %arg1, %c0_i32 : i32
    %1 = arith.extui %0 : i1 to i32
    %c0_i32_0 = arith.constant 0 : i32
    %2 = arith.cmpi ne, %1, %c0_i32_0 : i32
    scf.if %2 {
      %cst_10 = arith.constant 0.000000e+00 : f32
      %12 = vector.broadcast %cst_10 : f32 to vector<32x128xf32>
      %c0_11 = arith.constant 0 : index
      %c0_12 = arith.constant 0 : index
      %13 = vector.load %arg7[%c0_11, %c0_12] : memref<32x128xf32, #tpu.memory_space<vmem>>, vector<32x128xf32>
      tpu.vector_store %arg7[%c0_11, %c0_12], %12 {strides = array<i32>} : memref<32x128xf32, #tpu.memory_space<vmem>>, vector<32x128xf32>,
    } else {
    }
    %c0 = arith.constant 0 : index
    %c0_1 = arith.constant 0 : index
    %3 = vector.load %arg7[%c0, %c0_1] : memref<32x128xf32, #tpu.memory_space<vmem>>, vector<32x128xf32>
    %c0_2 = arith.constant 0 : index
    %c0_3 = arith.constant 0 : index
    %4 = vector.load %arg2[%c0_2, %c0_3] : memref<32x128xbf16, #tpu.memory_space<vmem>>, vector<32x128xbf16>
    %c0_4 = arith.constant 0 : index
    %c0_5 = arith.constant 0 : index
    %5 = vector.load %arg3[%c0_4, %c0_5] : memref<128x128xbf16, #tpu.memory_space<vmem>>, vector<128x128xbf16>
    %cst = arith.constant dense<0.000000e+00> : vector<32x128xf32>
    %6 = tpu.matmul %4, %5, %cst {dimension_numbers = #tpu.dot_dimension_numbers<[1], [0], [0], [1], [0, 0, 1, 1], [], []>} : vector<32x128xbf16>, vector<128x128xbf16>, vector<32x128xf32> -> vector<32x128xf32>
    %7 = arith.addf %3, %6 : vector<32x128xf32>
    %c0_6 = arith.constant 0 : index
    %c0_7 = arith.constant 0 : index
    %8 = vector.load %arg7[%c0_6, %c0_7] : memref<32x128xf32, #tpu.memory_space<vmem>>, vector<32x128xf32>
    tpu.vector_store %arg7[%c0_6, %c0_7], %7 {strides = array<i32>} : memref<32x128xf32, #tpu.memory_space<vmem>>, vector<32x128xf32>,
    %c0_i32_8 = arith.constant 0 : i32
    %9 = arith.cmpi eq, %arg1, %c0_i32_8 : i32
    %10 = arith.extui %9 : i1 to i32
    %c0_i32_9 = arith.constant 0 : i32
    %11 = arith.cmpi ne, %10, %c0_i32_9 : i32
    scf.if %11 {
      %c0_10 = arith.constant 0 : index
      %c0_11 = arith.constant 0 : index
      %12 = vector.load %arg7[%c0_10, %c0_11] : memref<32x128xf32, #tpu.memory_space<vmem>>, vector<32x128xf32>
      %c0_12 = arith.constant 0 : index
      %c0_13 = arith.constant 0 : index
      %13 = vector.load %arg4[%c0_12, %c0_13] : memref<32x32xf32, #tpu.memory_space<vmem>>, vector<32x32xf32>
      %c0_14 = arith.constant 0 : index
      %c0_15 = arith.constant 0 : index
      %14 = vector.load %arg5[%c0_14, %c0_15] : memref<32x1xf32, #tpu.memory_space<vmem>>, vector<32x1xf32>
      %15 = vector.broadcast %14 : vector<32x1xf32> to vector<32x128xf32>
      %16 = arith.addf %12, %15 : vector<32x128xf32>
      %17 = math.tanh %16 : vector<32x128xf32>
      %cst_16 = arith.constant dense<0.000000e+00> : vector<32x128xf32>
      %18 = tpu.matmul %13, %17, %cst_16 {dimension_numbers = #tpu.dot_dimension_numbers<[1], [0], [0], [1], [0, 0, 1, 1], [], []>} : vector<32x32xf32>, vector<32x128xf32>, vector<32x128xf32> -> vector<32x128xf32>
      %19 = arith.truncf %18 : vector<32x128xf32> to vector<32x128xbf16>
      %c0_17 = arith.constant 0 : index
      %c0_18 = arith.constant 0 : index
      %20 = vector.load %arg6[%c0_17, %c0_18] : memref<32x128xbf16, #tpu.memory_space<vmem>>, vector<32x128xbf16>
      tpu.vector_store %arg6[%c0_17, %c0_18], %19 {strides = array<i32>} : memref<32x128xbf16, #tpu.memory_space<vmem>>, vector<32x128xbf16>,
    } else {
    }
    return
  }
  func.func @transform_0(%arg0: i32, %arg1: i32) -> (i32, i32) {
    %c0_i32 = arith.constant 0 : i32
    %c0_i32_0 = arith.constant 0 : i32
    return %c0_i32, %arg1 : i32, i32
  }
  func.func @transform_1(%arg0: i32, %arg1: i32) -> (i32, i32) {
    %c0_i32 = arith.constant 0 : i32
    return %arg1, %arg0 : i32, i32
  }
  func.func @transform_2(%arg0: i32, %arg1: i32) -> (i32, i32) {
    %c0_i32 = arith.constant 0 : i32
    %c0_i32_0 = arith.constant 0 : i32
    %c0_i32_1 = arith.constant 0 : i32
    return %c0_i32, %c0_i32_0 : i32, i32
  }
  func.func @transform_3(%arg0: i32, %arg1: i32) -> (i32, i32) {
    %c0_i32 = arith.constant 0 : i32
    %c0_i32_0 = arith.constant 0 : i32
    %c0_i32_1 = arith.constant 0 : i32
    return %c0_i32, %c0_i32_0 : i32, i32
  }
  func.func @transform_4(%arg0: i32, %arg1: i32) -> (i32, i32) {
    %c0_i32 = arith.constant 0 : i32
    %c0_i32_0 = arith.constant 0 : i32
    return %c0_i32, %arg0 : i32, i32
  }
}

</mosaic_0001>

<llo_original>
// kernel: tpu_custom_call.1
$region0: #{tpu_custom_call.1}
  #allocation0 [shape = 'u32[]', space=smem, size = 0x4, offset = 0x4, fixed_abs, tag = 'smem constant byte address 0x4 - core index']
  #allocation1 [shape = 'u32[144,128]{1,0:T(1,128)}', space=vmem, size = 0x12000, scoped, tag = 'internal scratch']
  #allocation2 [shape = 'f32[32,128]{1,0:T(8,128)}', space=vmem, size = 0x4000, scoped, tag = 'scratch operand']
  %s0 = inlined_call_operand.hbm [shape: bf16[32,128], index: 0, kind: input, shape index: {}]
  %s1 = inlined_call_operand.hbm [shape: bf16[128,128], index: 1, kind: input, shape index: {}]
  %s2 = inlined_call_operand.vmem [shape: f32[32,32], index: 2, kind: input, shape index: {}]
  %s3 = inlined_call_operand.vmem [shape: f32[32,1], index: 3, kind: input, shape index: {}]
  %s4 = inlined_call_operand.hbm [shape: bf16[32,128], index: 4, kind: output, shape index: {}]
  %s5 = sld [smem:[#allocation0]]
  $region42: #{tpu_custom_call.1} parent=0
    _
  %s7 = ssub.s32 1, %s5
  %s8 = scalar_select 0, %s7, %s5
  $region1: #{tpu_custom_call.1} parent=0
    #allocation3 [shape = 'u8[8192]{0}', space=vmem, size = 0x2000, scoped, tag = 'input window, operand 0, single buffered']
    #allocation4 [shape = 's32[1]{0}', space=sflag, size = 0x4, scoped, tag = 'scoped memory for tpu_custom_call.1']
    #allocation5 [shape = 's32[1]{0}', space=sflag, size = 0x4, scoped, tag = 'scoped memory for tpu_custom_call.1']
    #allocation6 [shape = 'u8[32768]{0}', space=vmem, size = 0x8000, scoped, tag = 'input window, operand 1, single buffered']
    #allocation7 [shape = 's32[1]{0}', space=sflag, size = 0x4, scoped, tag = 'scoped memory for tpu_custom_call.1']
    #allocation8 [shape = 'u8[8192]{0}', space=vmem, size = 0x2000, scoped, tag = 'output window, operand 0, single buffered']
    %9 = vsyncpa [#allocation4], 0
    %10 = vsyncpa [#allocation7], 0
    %11 = vsyncpa [#allocation5], 0
    // Predicated region
    $region2: #{tpu_custom_call.1} parent=1 // pred_check
      _
    $region3: #{tpu_custom_call.1} parent=1 // pred_check_branch
      %13 = sbr.rel (0) target = $region5
    $region4: #{tpu_custom_call.1} parent=1 // pred_region
      %s15 = ssub.s32 256, 256
      %16 = vsyncadd [#allocation4], %s15
      %s17 = sshll.u32 [#allocation3], 4
      %s18 = int_to_ptr.vmem [resolvable:$true] %s17
      %23 = dma.hbm_to_vmem [thread:$0]  %s0, 256, %s18, [#allocation4], 64, 64, 4
    $region5: #{tpu_custom_call.1} parent=1 // pred_fallthru
      _
    // Predicated region
    $region6: #{tpu_custom_call.1} parent=1 // pred_check
      _
    $region7: #{tpu_custom_call.1} parent=1 // pred_check_branch
      %25 = sbr.rel (0) target = $region9
    $region8: #{tpu_custom_call.1} parent=1 // pred_region
      %s27 = ssub.s32 1024, 1024
      %28 = vsyncadd [#allocation7], %s27
      %s29 = sshll.u32 [#allocation6], 4
      %s30 = int_to_ptr.vmem [resolvable:$true] %s29
      %35 = dma.hbm_to_vmem [thread:$0]  %s1, 1024, %s30, [#allocation7], 64, 64, 4
    $region9: #{tpu_custom_call.1} parent=1 // pred_fallthru
      _
    // Predicated region
    $region10: #{tpu_custom_call.1} parent=1 // pred_check
      _
    $region11: #{tpu_custom_call.1} parent=1 // pred_check_branch
      %37 = sbr.rel (0) target = $region13
    $region12: #{tpu_custom_call.1} parent=1 // pred_region
      _
    $region13: #{tpu_custom_call.1} parent=1 // pred_fallthru
      _
    // Predicated region
    $region14: #{tpu_custom_call.1} parent=1 // pred_check
      _
    $region15: #{tpu_custom_call.1} parent=1 // pred_check_branch
      %39 = sbr.rel (0) target = $region17
    $region16: #{tpu_custom_call.1} parent=1 // pred_region
      _
    $region17: #{tpu_custom_call.1} parent=1 // pred_fallthru
      _
    // Predicated region
    $region18: #{tpu_custom_call.1} parent=1 // pred_check
      _
    $region19: #{tpu_custom_call.1} parent=1 // pred_check_branch
      %41 = sbr.rel (0) target = $region21
    $region20: #{tpu_custom_call.1} parent=1 // pred_region
      %42 = dma.done [#allocation4], 256
    $region21: #{tpu_custom_call.1} parent=1 // pred_fallthru
      _
    // Predicated region
    $region22: #{tpu_custom_call.1} parent=1 // pred_check
      _
    $region23: #{tpu_custom_call.1} parent=1 // pred_check_branch
      %44 = sbr.rel (0) target = $region25
    $region24: #{tpu_custom_call.1} parent=1 // pred_region
      %45 = dma.done [#allocation7], 1024
    $region25: #{tpu_custom_call.1} parent=1 // pred_fallthru
      _
    %p47 = scmp.eq.s32.totalorder 0, 0
    // Predicated region
    $region26: #{tpu_custom_call.1} parent=1 // pred_check
      %p48 = pneg %p47
    $region27: #{tpu_custom_call.1} parent=1 // pred_check_branch
      %50 = sbr.rel (%p48) target = $region29
    $region28: #{tpu_custom_call.1} parent=1 // pred_region
      %51 = vst [vmem:[#allocation2] sm:$0xff] 0.0
      %52 = vst [vmem:[#allocation2 + $0x8] sm:$0xff] 0.0
      %53 = vst [vmem:[#allocation2 + $0x10] sm:$0xff] 0.0
      %54 = vst [vmem:[#allocation2 + $0x18] sm:$0xff] 0.0
    $region29: #{tpu_custom_call.1} parent=1 // pred_fallthru
      _
    %v55 = vld [vmem:[#allocation2] sm:$0xff]
    %v56 = vld [vmem:[#allocation2 + $0x8] sm:$0xff]
    %v57 = vld [vmem:[#allocation2 + $0x10] sm:$0xff]
    %v58 = vld [vmem:[#allocation2 + $0x18] sm:$0xff]
    %v59 = vld [vmem:[#allocation3] sm:$0xf]
    %v60 = vld [vmem:[#allocation3 + $0x4] sm:$0xf]
    %v61 = vld [vmem:[#allocation3 + $0x8] sm:$0xf]
    %v62 = vld [vmem:[#allocation3 + $0xc] sm:$0xf]
    %v63 = vld [vmem:[#allocation6] sm:$0xf]
    %v64 = vld [vmem:[#allocation6 + $0x4] sm:$0xf]
    %v65 = vld [vmem:[#allocation6 + $0x8] sm:$0xf]
    %v66 = vld [vmem:[#allocation6 + $0xc] sm:$0xf]
    %v67 = vld [vmem:[#allocation6 + $0x10] sm:$0xf]
    %v68 = vld [vmem:[#allocation6 + $0x14] sm:$0xf]
    %v69 = vld [vmem:[#allocation6 + $0x18] sm:$0xf]
    %v70 = vld [vmem:[#allocation6 + $0x1c] sm:$0xf]
    %v71 = vld [vmem:[#allocation6 + $0x20] sm:$0xf]
    %v72 = vld [vmem:[#allocation6 + $0x24] sm:$0xf]
    %v73 = vld [vmem:[#allocation6 + $0x28] sm:$0xf]
    %v74 = vld [vmem:[#allocation6 + $0x2c] sm:$0xf]
    %v75 = vld [vmem:[#allocation6 + $0x30] sm:$0xf]
    %v76 = vld [vmem:[#allocation6 + $0x34] sm:$0xf]
    %v77 = vld [vmem:[#allocation6 + $0x38] sm:$0xf]
    %v78 = vld [vmem:[#allocation6 + $0x3c] sm:$0xf]
    %v83 = vunpack.c.l.b16 %v59
    %v84 = vunpack.c.l.b16 %v60
    %v85 = vunpack.c.l.b16 %v61
    %v86 = vunpack.c.l.b16 %v62
    %v87 = vpack.c.b16 %v84, %v83
    %v88 = vpack.c.b16 %v86, %v85
    %v107 = vunpack.c.l.b16 %v63
    %v108 = vunpack.c.l.b16 %v64
    %v109 = vunpack.c.l.b16 %v65
    %v110 = vunpack.c.l.b16 %v66
    %v111 = vunpack.c.l.b16 %v67
    %v112 = vunpack.c.l.b16 %v68
    %v113 = vunpack.c.l.b16 %v69
    %v114 = vunpack.c.l.b16 %v70
    %v115 = vunpack.c.l.b16 %v71
    %v116 = vunpack.c.l.b16 %v72
    %v117 = vunpack.c.l.b16 %v73
    %v118 = vunpack.c.l.b16 %v74
    %v119 = vunpack.c.l.b16 %v75
    %v120 = vunpack.c.l.b16 %v76
    %v121 = vunpack.c.l.b16 %v77
    %v122 = vunpack.c.l.b16 %v78
    %v123 = vpack.c.b16 %v108, %v107
    %v124 = vpack.c.b16 %v110, %v109
    %v125 = vpack.c.b16 %v112, %v111
    %v126 = vpack.c.b16 %v114, %v113
    %v127 = vpack.c.b16 %v116, %v115
    %v128 = vpack.c.b16 %v118, %v117
    %v129 = vpack.c.b16 %v120, %v119
    %v130 = vpack.c.b16 %v122, %v121
    %139 = vmatprep.subr.bf16.mxu0 0
    %140 = vmatpush1.bf16.msra.mxu0 %v130
    %141 = vmatprep.subr.bf16.mxu0 0
    %142 = vmatpush1.bf16.msra.mxu0 %v129
    %143 = vmatprep.subr.bf16.mxu0 0
    %144 = vmatpush1.bf16.msra.mxu0 %v128
    %145 = vmatprep.subr.bf16.mxu0 0
    %146 = vmatpush1.bf16.msra.mxu0 %v127
    %147 = vmatprep.subr.bf16.mxu0 0
    %148 = vmatpush1.bf16.msra.mxu0 %v126
    %149 = vmatprep.subr.bf16.mxu0 0
    %150 = vmatpush1.bf16.msra.mxu0 %v125
    %151 = vmatprep.subr.bf16.mxu0 0
    %152 = vmatpush1.bf16.msra.mxu0 %v124
    %153 = vmatprep.subr.bf16.mxu0 0
    %154 = vmatpush1.bf16.msra.mxu0 %v123
    %155 = vmatprep.subr.bf16.mxu0 0
    %156 = vmatpush2.bf16.msra.mxu0 0
    %157 = vmatprep.subr.bf16.mxu0 0
    %158 = vmatpush2.bf16.msra.mxu0 0
    %159 = vmatprep.subr.bf16.mxu0 0
    %160 = vmatpush2.bf16.msra.mxu0 0
    %161 = vmatprep.subr.bf16.mxu0 0
    %162 = vmatpush2.bf16.msra.mxu0 0
    %163 = vmatprep.subr.bf16.mxu0 0
    %164 = vmatpush2.bf16.msra.mxu0 0
    %165 = vmatprep.subr.bf16.mxu0 0
    %166 = vmatpush2.bf16.msra.mxu0 0
    %167 = vmatprep.subr.bf16.mxu0 0
    %168 = vmatpush2.bf16.msra.mxu0 0
    %169 = vmatprep.subr.bf16.mxu0 0
    %170 = vmatpush2.bf16.msra.mxu0 0
    %171 = vmatprep.mubr.bf16.mxu0 0
    %172 = vmatmul.mubr.bf16.gmra.mxu0 %v87
    %v173 = vpop.f32.mrf.mxu0
    %v174 = vadd.f32 0.0, %v173
    %v175 = vpop.f32.mrf.mxu0
    %v176 = vpop.f32.mrf.mxu0
    %v177 = vadd.f32 0.0, %v176
    %v178 = vpop.f32.mrf.mxu0
    %179 = vmatprep.mubr.bf16.mxu0 0
    %180 = vmatmul.mubr.bf16.gmra.mxu0 %v88
    %v181 = vpop.f32.mrf.mxu0
    %v182 = vadd.f32 0.0, %v181
    %v183 = vpop.f32.mrf.mxu0
    %v184 = vpop.f32.mrf.mxu0
    %v185 = vadd.f32 0.0, %v184
    %v186 = vpop.f32.mrf.mxu0
    %187 = vdwg.mxu0
    %v188 = vadd.f32 %v55, %v174
    %v189 = vadd.f32 %v56, %v177
    %v190 = vadd.f32 %v57, %v182
    %v191 = vadd.f32 %v58, %v185
    %192 = vst [vmem:[#allocation2] sm:$0xff] %v188
    %193 = vst [vmem:[#allocation2 + $0x8] sm:$0xff] %v189
    %194 = vst [vmem:[#allocation2 + $0x10] sm:$0xff] %v190
    %195 = vst [vmem:[#allocation2 + $0x18] sm:$0xff] %v191
    // Predicated region
    $region30: #{tpu_custom_call.1} parent=1 // pred_check
      %p196 = pneg %p47
    $region31: #{tpu_custom_call.1} parent=1 // pred_check_branch
      %198 = sbr.rel (%p196) target = $region33
    $region32: #{tpu_custom_call.1} parent=1 // pred_region
      %v199 = vld [vmem:[#allocation2] sm:$0xff]
      %v200 = vld [vmem:[#allocation2 + $0x8] sm:$0xff]
      %v201 = vld [vmem:[#allocation2 + $0x10] sm:$0xff]
      %v202 = vld [vmem:[#allocation2 + $0x18] sm:$0xff]
      %v203 = vld [vmem:[%s2] sm:$0xff]
      %v204 = vld [vmem:[%s2 + $0x8] sm:$0xff]
      %v205 = vld [vmem:[%s2 + $0x10] sm:$0xff]
      %v206 = vld [vmem:[%s2 + $0x18] sm:$0xff]
      %v207 = vld [vmem:[%s3] sm:$0xff]
      %v208 = vld [vmem:[%s3 + $0x8] sm:$0xff]
      %v209 = vld [vmem:[%s3 + $0x10] sm:$0xff]
      %v210 = vld [vmem:[%s3 + $0x18] sm:$0xff]
      %212 = vset.pattern.permute.xlu0 0
      %213 = vperm.xlu0 %212, %v207
      %v214 = vpop.permute.xlu0 %213
      %217 = vset.pattern.permute.xlu0 0
      %218 = vperm.xlu0 %217, %v208
      %v219 = vpop.permute.xlu0 %218
      %222 = vset.pattern.permute.xlu0 0
      %223 = vperm.xlu0 %222, %v209
      %v224 = vpop.permute.xlu0 %223
      %227 = vset.pattern.permute.xlu0 0
      %228 = vperm.xlu0 %227, %v210
      %v229 = vpop.permute.xlu0 %228
      %v231 = vadd.f32 %v199, %v214
      %v232 = vadd.f32 %v200, %v219
      %v233 = vadd.f32 %v201, %v224
      %v234 = vadd.f32 %v202, %v229
      %v235 = vtanh.pop %v231
      %v236 = vtanh.pop %v232
      %v237 = vtanh.pop %v233
      %v238 = vtanh.pop %v234
      %vm239 = vcmask 261120
      %v241 = vsel %vm239, %v203, 0
      %v244 = vsel %vm239, %v204, 0
      %v247 = vsel %vm239, %v205, 0
      %v250 = vsel %vm239, %v206, 0
      %252 = vmatprep.subr.mxu0 0.0
      %253 = vmatpush1.msra.mxu0 0.0
      %254 = vmatprep.subr.mxu0 0.0
      %255 = vmatpush1.msra.mxu0 0.0
      %256 = vmatprep.subr.mxu0 0.0
      %257 = vmatpush1.msra.mxu0 0.0
      %258 = vmatprep.subr.mxu0 0.0
      %259 = vmatpush1.msra.mxu0 0.0
      %260 = vmatprep.subr.mxu0 0.0
      %261 = vmatpush1.msra.mxu0 0.0
      %262 = vmatprep.subr.mxu0 0.0
      %263 = vmatpush1.msra.mxu0 0.0
      %264 = vmatprep.subr.mxu0 0.0
      %265 = vmatpush1.msra.mxu0 0.0
      %266 = vmatprep.subr.mxu0 0.0
      %267 = vmatpush1.msra.mxu0 0.0
      %268 = vmatprep.subr.mxu0 0.0
      %269 = vmatpush1.msra.mxu0 0.0
      %270 = vmatprep.subr.mxu0 0.0
      %271 = vmatpush1.msra.mxu0 0.0
      %272 = vmatprep.subr.mxu0 0.0
      %273 = vmatpush1.msra.mxu0 0.0
      %274 = vmatprep.subr.mxu0 0.0
      %275 = vmatpush1.msra.mxu0 0.0
      %276 = vmatprep.subr.mxu0 0.0
      %277 = vmatpush1.msra.mxu0 %v238
      %278 = vmatprep.subr.mxu0 0.0
      %279 = vmatpush1.msra.mxu0 %v237
      %280 = vmatprep.subr.mxu0 0.0
      %281 = vmatpush1.msra.mxu0 %v236
      %282 = vmatprep.subr.mxu0 0.0
      %283 = vmatpush1.msra.mxu0 %v235
      %284 = vmatprep.subr.mxu0 0.0
      %285 = vmatpush2.msra.mxu0 0.0
      %286 = vmatprep.subr.mxu0 0.0
      %287 = vmatpush2.msra.mxu0 0.0
      %288 = vmatprep.subr.mxu0 0.0
      %289 = vmatpush2.msra.mxu0 0.0
      %290 = vmatprep.subr.mxu0 0.0
      %291 = vmatpush2.msra.mxu0 0.0
      %292 = vmatprep.subr.mxu0 0.0
      %293 = vmatpush2.msra.mxu0 0.0
      %294 = vmatprep.subr.mxu0 0.0
      %295 = vmatpush2.msra.mxu0 0.0
      %296 = vmatprep.subr.mxu0 0.0
      %297 = vmatpush2.msra.mxu0 0.0
      %298 = vmatprep.subr.mxu0 0.0
      %299 = vmatpush2.msra.mxu0 0.0
      %300 = vmatprep.subr.mxu0 0.0
      %301 = vmatpush2.msra.mxu0 0.0
      %302 = vmatprep.subr.mxu0 0.0
      %303 = vmatpush2.msra.mxu0 0.0
      %304 = vmatprep.subr.mxu0 0.0
      %305 = vmatpush2.msra.mxu0 0.0
      %306 = vmatprep.subr.mxu0 0.0
      %307 = vmatpush2.msra.mxu0 0.0
      %308 = vmatprep.subr.mxu0 0.0
      %309 = vmatpush2.msra.mxu0 0.0
      %310 = vmatprep.subr.mxu0 0.0
      %311 = vmatpush2.msra.mxu0 0.0
      %312 = vmatprep.subr.mxu0 0.0
      %313 = vmatpush2.msra.mxu0 0.0
      %314 = vmatprep.subr.mxu0 0.0
      %315 = vmatpush2.msra.mxu0 0.0
      %316 = vmatprep.mubr.f32.mxu0 0.0
      %317 = vmatmul.mubr.f32.gmra.mxu0 %v241
      %v318 = vpop.f32.mrf.mxu0
      %v319 = vadd.f32 0.0, %v318
      %v320 = vpop.f32.mrf.mxu0
      %321 = vmatprep.mubr.f32.mxu0 0.0
      %322 = vmatmul.mubr.f32.gmra.mxu0 %v244
      %v323 = vpop.f32.mrf.mxu0
      %v324 = vadd.f32 0.0, %v323
      %v325 = vpop.f32.mrf.mxu0
      %326 = vmatprep.mubr.f32.mxu0 0.0
      %327 = vmatmul.mubr.f32.gmra.mxu0 %v247
      %v328 = vpop.f32.mrf.mxu0
      %v329 = vadd.f32 0.0, %v328
      %v330 = vpop.f32.mrf.mxu0
      %331 = vmatprep.mubr.f32.mxu0 0.0
      %332 = vmatmul.mubr.f32.gmra.mxu0 %v250
      %v333 = vpop.f32.mrf.mxu0
      %v334 = vadd.f32 0.0, %v333
      %v335 = vpop.f32.mrf.mxu0
      %336 = vdwg.mxu0
      %v337 = vpack.c.bf16 %v324, %v319
      %v338 = vpack.c.bf16 %v334, %v329
      %v341 = vunpack.c.l.b16 %v337
      %v342 = vunpack.c.h.b16 %v337
      %v343 = vunpack.c.l.b16 %v338
      %v344 = vunpack.c.h.b16 %v338
      %v345 = vpack.c.b16 %v341, %v341
      %v346 = vpack.c.b16 %v342, %v342
      %v347 = vpack.c.b16 %v343, %v343
      %v348 = vpack.c.b16 %v344, %v344
      %353 = vst [vmem:[#allocation8] sm:$0xf] %v345
      %354 = vst [vmem:[#allocation8 + $0x4] sm:$0xf] %v346
      %355 = vst [vmem:[#allocation8 + $0x8] sm:$0xf] %v347
      %356 = vst [vmem:[#allocation8 + $0xc] sm:$0xf] %v348
    $region33: #{tpu_custom_call.1} parent=1 // pred_fallthru
      _
    // Predicated region
    $region34: #{tpu_custom_call.1} parent=1 // pred_check
      _
    $region35: #{tpu_custom_call.1} parent=1 // pred_check_branch
      %358 = sbr.rel (0) target = $region37
    $region36: #{tpu_custom_call.1} parent=1 // pred_region
      %s360 = ssub.s32 256, 256
      %361 = vsyncadd [#allocation5], %s360
      %s362 = sshll.u32 [#allocation8], 4
      %s363 = int_to_ptr.vmem [resolvable:$true] %s362
      %368 = dma.vmem_to_hbm [thread:$0]  %s363, 256, %s4, [#allocation5], 64, 64, 4
    $region37: #{tpu_custom_call.1} parent=1 // pred_fallthru
      _
    // Predicated region
    $region38: #{tpu_custom_call.1} parent=1 // pred_check
      _
    $region39: #{tpu_custom_call.1} parent=1 // pred_check_branch
      %370 = sbr.rel (0) target = $region41
    $region40: #{tpu_custom_call.1} parent=1 // pred_region
      %371 = dma.done [#allocation5], 256
    $region41: #{tpu_custom_call.1} parent=1 // pred_fallthru
      _
    %372 = vsyncpa [#allocation4], 1
    %373 = vsyncpa [#allocation7], 1
    %374 = vsyncpa [#allocation5], 1

</llo_original>
